<compile_context>
chip_gen: v7x
topology: tpu7x:2x2x1
jax: 0.10.0
libtpu: 0.0.40
codegen_flags: <defaults>
</compile_context>

<pallas_src>
import jax
import jax.numpy as jnp
import numpy as np
from jax.experimental import pallas as pl
from jax.experimental.pallas import tpu as pltpu


# ----------------------------------------------------------------------------------
# Pallas kernel: Bt images per (parallel) grid step.
# ----------------------------------------------------------------------------------
def _se_kernel(x_ref, w1_ref, b1_ref, w2_ref, b2_ref, o_ref):
    # x_ref / o_ref : (Bt, C, HW)   HW on the 128-lane axis, C on sublanes
    # w1_ref        : (1, C, Cse)   conv1 weight laid out so w1[0, c, o] = W1[o, c]
    # b1_ref        : (1, 1, Cse)
    # w2_ref        : (1, C, Cse)   conv2 weight, w2[0, c, o] = W2[c, o] (untransposed)
    # b2_ref        : (1, C, 1)
    x = x_ref[...]
    inv_hw = 1.0 / x_ref.shape[2]

    # --- global average pool over the spatial (lane) axis, f32 accumulation ---------
    avg = jnp.sum(x.astype(jnp.float32), axis=2, keepdims=True) * inv_hw   # (Bt, C, 1)

    # --- squeeze: 1x1 conv + ReLU (broadcast-multiply + sublane reduce, VPU/XLU) ----
    h1 = jnp.sum(avg * w1_ref[...], axis=1, keepdims=True) + b1_ref[...]   # (Bt, 1, Cse)
    h1 = jnp.maximum(h1, 0.0)

    # --- excite: 1x1 conv + Hardsigmoid (broadcast-multiply + lane reduce) ----------
    h2 = jnp.sum(h1 * w2_ref[...], axis=2, keepdims=True) + b2_ref[...]    # (Bt, C, 1)
    gate = jnp.clip(h2 * (1.0 / 6.0) + 0.5, 0.0, 1.0)                      # (Bt, C, 1)

    # --- scale: broadcast per-(image, channel) gate over all HW lanes ---------------
    o_ref[...] = x * gate.astype(x.dtype)                                  # (Bt, C, HW)


# ----------------------------------------------------------------------------------
# Batch-tile choice: ~4 MiB of input per step, full blocks only, and keep at least
# two grid steps when possible so v7x's two TensorCores are both used.
# ----------------------------------------------------------------------------------
def _pick_batch_tile(batch, per_image_bytes, target_bytes=4 << 20):
    bt = int(max(1, min(batch, target_bytes // max(per_image_bytes, 1))))
    while batch % bt:                       # only full blocks
        bt -= 1
    if batch // bt < 2 and batch >= 2:      # >=2 parallel steps for the v7x megacore
        bt = batch // 2
        while batch % bt:
            bt -= 1
    return bt


# ----------------------------------------------------------------------------------
# Wrapper: NCHW -> (B, C, H*W) reshape (free), pallas_call, reshape back.
# ----------------------------------------------------------------------------------
def se_module_forward(x_nchw, p):
    B, C, H, W = x_nchw.shape
    HW = H * W
    dtype = x_nchw.dtype
    itemsize = jnp.dtype(dtype).itemsize

    x3 = x_nchw.reshape(B, C, HW)           # pure reshape, no transpose glue

    bt = _pick_batch_tile(B, C * HW * itemsize)
    tile_bytes = bt * C * HW * itemsize
    # double-buffered in + out tiles + weights + headroom; capped for v7x's 64 MiB VMEM
    vmem_limit = int(min(48 << 20, max(32 << 20, 6 * tile_bytes)))

    def const3(arr):
        return pl.BlockSpec(arr.shape, lambda b: (0, 0, 0))

    y3 = pl.pallas_call(
        _se_kernel,
        out_shape=jax.ShapeDtypeStruct((B, C, HW), dtype),
        grid=(B // bt,),
        in_specs=[pl.BlockSpec((bt, C, HW), lambda b: (b, 0, 0)),
                  const3(p["w1"]), const3(p["b1"]),
                  const3(p["w2"]), const3(p["b2"])],
        out_specs=pl.BlockSpec((bt, C, HW), lambda b: (b, 0, 0)),
        input_output_aliases={0: 0},        # out reuses x3's HBM buffer (x is donated)
        compiler_params=pltpu.CompilerParams(
            dimension_semantics=("parallel",),
            vmem_limit_bytes=vmem_limit),
    )(x3, p["w1"], p["b1"], p["w2"], p["b2"])

    return y3.reshape(B, C, H, W)


# ----------------------------------------------------------------------------------
# Deterministic parameter construction (PyTorch layout), kernel-layout conversion,
# and a pure-JAX NCHW reference used only to verify the kernel.
# ----------------------------------------------------------------------------------
def init_params(key, channel, reduction=4):
    cse = channel // reduction
    k1, k2, k3, k4 = jax.random.split(key, 4)
    return dict(
        w1=jax.random.normal(k1, (cse, channel, 1, 1), jnp.float32) * 0.3,   # conv1
        b1=jax.random.normal(k2, (cse,), jnp.float32) * 0.1,
        w2=jax.random.normal(k3, (channel, cse, 1, 1), jnp.float32) * 0.3,   # conv2
        b2=jax.random.normal(k4, (channel,), jnp.float32) * 0.1,
    )


def to_kernel_params(tp):
    w1 = tp["w1"][:, :, 0, 0]                    # (Cse, C)
    w2 = tp["w2"][:, :, 0, 0]                    # (C, Cse)
    return dict(
        w1=jnp.transpose(w1)[None, :, :],        # (1, C, Cse):  w1[0,c,o] = W1[o,c]
        b1=tp["b1"].reshape(1, 1, -1),           # (1, 1, Cse)
        w2=w2[None, :, :],                       # (1, C, Cse):  w2[0,c,o] = W2[c,o]
        b2=tp["b2"].reshape(1, -1, 1),           # (1, C, 1)
    )


def _conv1x1_nchw(x, w, b):
    out = jax.lax.conv_general_dilated(
        x, w, (1, 1), [(0, 0), (0, 0)],
        dimension_numbers=("NCHW", "OIHW", "NCHW"),
        precision=jax.lax.Precision.HIGHEST)
    return out + b[None, :, None, None]


def ref_forward(x, tp):
    avg = jnp.mean(x, axis=(2, 3), keepdims=True)                    # AdaptiveAvgPool2d(1)
    h1 = jnp.maximum(_conv1x1_nchw(avg, tp["w1"], tp["b1"]), 0.0)    # conv1 + ReLU
    h2 = _conv1x1_nchw(h1, tp["w2"], tp["b2"])                       # conv2
    gate = jnp.clip(h2 / 6.0 + 0.5, 0.0, 1.0)                        # Hardsigmoid
    return x * gate


if __name__ == "__main__":
    # SEModule(channel=16, reduction=4) on a (2, 16, 16, 16) input.
    B, C, H, W = 2, 16, 16, 16
    reduction = 4

    key = jax.random.PRNGKey(0)
    kx, kp = jax.random.split(key)
    x = jax.random.normal(kx, (B, C, H, W), jnp.float32)

    torch_params = init_params(kp, C, reduction)
    kernel_params = to_kernel_params(torch_params)

    # Reference first (x's buffer is donated to the kernel call below).
    ref = jax.block_until_ready(ref_forward(x, torch_params))

    se_forward = jax.jit(se_module_forward, donate_argnums=(0,))
    out = jax.block_until_ready(se_forward(x, kernel_params))

    np.testing.assert_allclose(np.asarray(out), np.asarray(ref), rtol=1e-4, atol=1e-4)
    print("KERNEL_OK")
</pallas_src>

<mosaic_0001>
module attributes {stable_mosaic.version = 11 : i64} {
  func.func @_se_kernel(%arg0: i32, %arg1: memref<1x16x256xf32, #tpu.memory_space<vmem>>, %arg2: memref<1x16x4xf32, #tpu.memory_space<vmem>>, %arg3: memref<1x1x4xf32, #tpu.memory_space<vmem>>, %arg4: memref<1x16x4xf32, #tpu.memory_space<vmem>>, %arg5: memref<1x16x1xf32, #tpu.memory_space<vmem>>, %arg6: memref<1x16x256xf32, #tpu.memory_space<vmem>>) attributes {dimension_semantics = [#tpu.dimension_semantics<parallel>], iteration_bounds = array<i64: 2>, scalar_prefetch = 0 : i64, scratch_operands = 0 : i64, tpu.core_type = #tpu.core_type<tc>, window_params = [{transform_indices = @transform_0, window_bounds = array<i64: 1, 16, 256>}, {pipeline_mode = #tpu.pipeline_mode<synchronous>, transform_indices = @transform_1, window_bounds = array<i64: 1, 16, 4>}, {pipeline_mode = #tpu.pipeline_mode<synchronous>, transform_indices = @transform_2, window_bounds = array<i64: 1, 1, 4>}, {pipeline_mode = #tpu.pipeline_mode<synchronous>, transform_indices = @transform_3, window_bounds = array<i64: 1, 16, 4>}, {pipeline_mode = #tpu.pipeline_mode<synchronous>, transform_indices = @transform_4, window_bounds = array<i64: 1, 16, 1>}, {transform_indices = @transform_5, window_bounds = array<i64: 1, 16, 256>}]} {
    %c0 = arith.constant 0 : index
    %c0_0 = arith.constant 0 : index
    %c0_1 = arith.constant 0 : index
    %0 = vector.load %arg1[%c0, %c0_0, %c0_1] : memref<1x16x256xf32, #tpu.memory_space<vmem>>, vector<1x16x256xf32>
    %cst = arith.constant dense<0.000000e+00> : vector<1x16xf32>
    %1 = vector.multi_reduction <add>, %0, %cst [2] : vector<1x16x256xf32> to vector<1x16xf32>
    %2 = vector.shape_cast %1 : vector<1x16xf32> to vector<1x16x1xf32>
    %cst_2 = arith.constant 3.906250e-03 : f32
    %3 = vector.broadcast %cst_2 : f32 to vector<1x16x1xf32>
    %4 = arith.mulf %2, %3 : vector<1x16x1xf32>
    %c0_3 = arith.constant 0 : index
    %c0_4 = arith.constant 0 : index
    %c0_5 = arith.constant 0 : index
    %5 = vector.load %arg2[%c0_3, %c0_4, %c0_5] : memref<1x16x4xf32, #tpu.memory_space<vmem>>, vector<1x16x4xf32>
    %6 = vector.broadcast %4 : vector<1x16x1xf32> to vector<1x16x4xf32>
    %7 = arith.mulf %6, %5 : vector<1x16x4xf32>
    %cst_6 = arith.constant dense<0.000000e+00> : vector<1x4xf32>
    %8 = vector.multi_reduction <add>, %7, %cst_6 [1] : vector<1x16x4xf32> to vector<1x4xf32>
    %9 = vector.shape_cast %8 : vector<1x4xf32> to vector<1x1x4xf32>
    %c0_7 = arith.constant 0 : index
    %c0_8 = arith.constant 0 : index
    %c0_9 = arith.constant 0 : index
    %10 = vector.load %arg3[%c0_7, %c0_8, %c0_9] : memref<1x1x4xf32, #tpu.memory_space<vmem>>, vector<1x1x4xf32>
    %11 = arith.addf %9, %10 : vector<1x1x4xf32>
    %cst_10 = arith.constant 0.000000e+00 : f32
    %12 = vector.broadcast %cst_10 : f32 to vector<1x1x4xf32>
    %13 = arith.maximumf %11, %12 : vector<1x1x4xf32>
    %c0_11 = arith.constant 0 : index
    %c0_12 = arith.constant 0 : index
    %c0_13 = arith.constant 0 : index
    %14 = vector.load %arg4[%c0_11, %c0_12, %c0_13] : memref<1x16x4xf32, #tpu.memory_space<vmem>>, vector<1x16x4xf32>
    %15 = vector.broadcast %13 : vector<1x1x4xf32> to vector<1x16x4xf32>
    %16 = arith.mulf %15, %14 : vector<1x16x4xf32>
    %cst_14 = arith.constant dense<0.000000e+00> : vector<1x16xf32>
    %17 = vector.multi_reduction <add>, %16, %cst_14 [2] : vector<1x16x4xf32> to vector<1x16xf32>
    %18 = vector.shape_cast %17 : vector<1x16xf32> to vector<1x16x1xf32>
    %c0_15 = arith.constant 0 : index
    %c0_16 = arith.constant 0 : index
    %c0_17 = arith.constant 0 : index
    %19 = vector.load %arg5[%c0_15, %c0_16, %c0_17] : memref<1x16x1xf32, #tpu.memory_space<vmem>>, vector<1x16x1xf32>
    %20 = arith.addf %18, %19 : vector<1x16x1xf32>
    %cst_18 = arith.constant 0.166666672 : f32
    %21 = vector.broadcast %cst_18 : f32 to vector<1x16x1xf32>
    %22 = arith.mulf %20, %21 : vector<1x16x1xf32>
    %cst_19 = arith.constant 5.000000e-01 : f32
    %23 = vector.broadcast %cst_19 : f32 to vector<1x16x1xf32>
    %24 = arith.addf %22, %23 : vector<1x16x1xf32>
    %cst_20 = arith.constant 0.000000e+00 : f32
    %cst_21 = arith.constant 1.000000e+00 : f32
    %25 = vector.broadcast %cst_20 : f32 to vector<1x16x1xf32>
    %26 = arith.maximumf %25, %24 : vector<1x16x1xf32>
    %27 = vector.broadcast %cst_21 : f32 to vector<1x16x1xf32>
    %28 = arith.minimumf %27, %26 : vector<1x16x1xf32>
    %29 = vector.broadcast %28 : vector<1x16x1xf32> to vector<1x16x256xf32>
    %30 = arith.mulf %0, %29 : vector<1x16x256xf32>
    %c0_22 = arith.constant 0 : index
    %c0_23 = arith.constant 0 : index
    %c0_24 = arith.constant 0 : index
    %31 = vector.load %arg6[%c0_22, %c0_23, %c0_24] : memref<1x16x256xf32, #tpu.memory_space<vmem>>, vector<1x16x256xf32>
    tpu.vector_store %arg6[%c0_22, %c0_23, %c0_24], %30 {strides = array<i32>} : memref<1x16x256xf32, #tpu.memory_space<vmem>>, vector<1x16x256xf32>,
    return
  }
  func.func @transform_0(%arg0: i32) -> (i32, i32, i32) {
    %c0_i32 = arith.constant 0 : i32
    %c0_i32_0 = arith.constant 0 : i32
    %c0_i32_1 = arith.constant 0 : i32
    return %arg0, %c0_i32, %c0_i32_0 : i32, i32, i32
  }
  func.func @transform_1(%arg0: i32) -> (i32, i32, i32) {
    %c0_i32 = arith.constant 0 : i32
    %c0_i32_0 = arith.constant 0 : i32
    %c0_i32_1 = arith.constant 0 : i32
    %c0_i32_2 = arith.constant 0 : i32
    return %c0_i32, %c0_i32_0, %c0_i32_1 : i32, i32, i32
  }
  func.func @transform_2(%arg0: i32) -> (i32, i32, i32) {
    %c0_i32 = arith.constant 0 : i32
    %c0_i32_0 = arith.constant 0 : i32
    %c0_i32_1 = arith.constant 0 : i32
    %c0_i32_2 = arith.constant 0 : i32
    return %c0_i32, %c0_i32_0, %c0_i32_1 : i32, i32, i32
  }
  func.func @transform_3(%arg0: i32) -> (i32, i32, i32) {
    %c0_i32 = arith.constant 0 : i32
    %c0_i32_0 = arith.constant 0 : i32
    %c0_i32_1 = arith.constant 0 : i32
    %c0_i32_2 = arith.constant 0 : i32
    return %c0_i32, %c0_i32_0, %c0_i32_1 : i32, i32, i32
  }
  func.func @transform_4(%arg0: i32) -> (i32, i32, i32) {
    %c0_i32 = arith.constant 0 : i32
    %c0_i32_0 = arith.constant 0 : i32
    %c0_i32_1 = arith.constant 0 : i32
    %c0_i32_2 = arith.constant 0 : i32
    return %c0_i32, %c0_i32_0, %c0_i32_1 : i32, i32, i32
  }
  func.func @transform_5(%arg0: i32) -> (i32, i32, i32) {
    %c0_i32 = arith.constant 0 : i32
    %c0_i32_0 = arith.constant 0 : i32
    %c0_i32_1 = arith.constant 0 : i32
    return %arg0, %c0_i32, %c0_i32_0 : i32, i32, i32
  }
}

</mosaic_0001>

<llo_original>
// kernel: se_module_forward.1
$region0: #{se_module_forward.1}
  #allocation0 [shape = 'u32[]', space=smem, size = 0x4, offset = 0x4, fixed_abs, tag = 'smem constant byte address 0x4 - core index']
  #allocation1 [shape = 'u32[144,128]{1,0:T(1,128)}', space=vmem, size = 0x12000, scoped, tag = 'internal scratch']
  %s0 = inlined_call_operand.vmem [shape: f32[2,16,256], index: 0, kind: input, shape index: {}, may-alias: {0,5}]
  %s1 = inlined_call_operand.vmem [shape: f32[1,16,4], index: 1, kind: input, shape index: {}]
  %s2 = inlined_call_operand.vmem [shape: f32[1,1,4], index: 2, kind: input, shape index: {}]
  %s3 = inlined_call_operand.vmem [shape: f32[1,16,4], index: 3, kind: input, shape index: {}]
  %s4 = inlined_call_operand.vmem [shape: f32[1,16,1], index: 4, kind: input, shape index: {}]
  %s5 = inlined_call_operand.vmem [shape: f32[2,16,256], index: 5, kind: output, shape index: {}, may-alias: {0,5}]
  %s6 = sld [smem:[#allocation0]]
  $region53: #{se_module_forward.1} parent=0
    _
  %s8 = ssub.s32 1, %s6
  %s9 = scalar_select 0, %s8, %s6
  loop: start=0, step=1, limit=4
  $region2: #{se_module_forward.1} parent=0 // loop_pre_header
    _
  $region3: #{se_module_forward.1} parent=0 // loop_header
    %s11 = sphi 0, %s15
    %p12 = scmp.ge.s32.totalorder %s11, 4
    %s21 = sphi 0, %s23
    %s24 = sphi 0, %s21
    %s25 = sphi 0, %s24
    %s41 = sphi 0, %s25
    %s45 = sphi 0, %s45
    %s47 = sphi 0, %s45
    %s48 = sphi 0, %s47
    %s62 = sphi 0, %s48
    %s66 = sphi 0, %s66
    %s68 = sphi 0, %s66
    %s69 = sphi 0, %s68
    %s83 = sphi 0, %s69
    %s87 = sphi 0, %s87
    %s89 = sphi 0, %s87
    %s90 = sphi 0, %s89
    %s104 = sphi 0, %s90
    %s108 = sphi 0, %s108
    %s110 = sphi 0, %s108
    %s111 = sphi 0, %s110
    %s125 = sphi 0, %s111
    %s131 = sphi 0, %s133
    %s134 = sphi 0, %s131
    %s135 = sphi 0, %s134
    %s151 = sphi 0, %s135
  $region4: #{se_module_forward.1} parent=0 // loop_header_branch
    %14 = sbr.rel (%p12) target = $region8
  $region5: #{se_module_forward.1} parent=0 // loop_body
    %s16 = ssub.s32 %s11, 1
    %s17 = ssub.s32 %s11, 2
    %s18 = sadd.s32 %s11, 1
    %s19 = ssub.s32 %s11, %s18
    %p20 = scmp.eq.s32.totalorder %s19, 0
    %s22 = sadd.s32 %s21, 1
    %s23 = scalar_select %p20, %s21, %s22
    %p26 = pneg %p20
    %p27 = scmp.eq.s32.totalorder %s11, 1
    %p28 = por %p26, %p27
    %p29 = scmp.ne.s32.totalorder %s21, %s24
    %p30 = scmp.eq.s32.totalorder %s11, 0
    %p31 = por %p29, %p30
    %p32 = scmp.ne.s32.totalorder %s21, %s24
    %p33 = scmp.eq.s32.totalorder %s16, 1
    %p34 = por %p32, %p33
    %p35 = scmp.ne.s32.totalorder %s24, %s25
    %p36 = scmp.eq.s32.totalorder %s16, 0
    %p37 = por %p35, %p36
    %p38 = scmp.ne.s32.totalorder %s24, %s25
    %p39 = scmp.eq.s32.totalorder %s17, 1
    %p40 = por %p38, %p39
    %p42 = scmp.ne.s32.totalorder %s25, %s41
    %p43 = scmp.eq.s32.totalorder %s17, 0
    %p44 = por %p42, %p43
    %s46 = sadd.s32 %s45, 1
    %p49 = scmp.eq.s32.totalorder %s11, 1
    %p50 = scmp.ne.s32.totalorder %s45, %s47
    %p51 = scmp.eq.s32.totalorder %s11, 0
    %p52 = por %p50, %p51
    %p53 = scmp.ne.s32.totalorder %s45, %s47
    %p54 = scmp.eq.s32.totalorder %s16, 1
    %p55 = por %p53, %p54
    %p56 = scmp.ne.s32.totalorder %s47, %s48
    %p57 = scmp.eq.s32.totalorder %s16, 0
    %p58 = por %p56, %p57
    %p59 = scmp.ne.s32.totalorder %s47, %s48
    %p60 = scmp.eq.s32.totalorder %s17, 1
    %p61 = por %p59, %p60
    %p63 = scmp.ne.s32.totalorder %s48, %s62
    %p64 = scmp.eq.s32.totalorder %s17, 0
    %p65 = por %p63, %p64
    %s67 = sadd.s32 %s66, 1
    %p70 = scmp.eq.s32.totalorder %s11, 1
    %p71 = scmp.ne.s32.totalorder %s66, %s68
    %p72 = scmp.eq.s32.totalorder %s11, 0
    %p73 = por %p71, %p72
    %p74 = scmp.ne.s32.totalorder %s66, %s68
    %p75 = scmp.eq.s32.totalorder %s16, 1
    %p76 = por %p74, %p75
    %p77 = scmp.ne.s32.totalorder %s68, %s69
    %p78 = scmp.eq.s32.totalorder %s16, 0
    %p79 = por %p77, %p78
    %p80 = scmp.ne.s32.totalorder %s68, %s69
    %p81 = scmp.eq.s32.totalorder %s17, 1
    %p82 = por %p80, %p81
    %p84 = scmp.ne.s32.totalorder %s69, %s83
    %p85 = scmp.eq.s32.totalorder %s17, 0
    %p86 = por %p84, %p85
    %s88 = sadd.s32 %s87, 1
    %p91 = scmp.eq.s32.totalorder %s11, 1
    %p92 = scmp.ne.s32.totalorder %s87, %s89
    %p93 = scmp.eq.s32.totalorder %s11, 0
    %p94 = por %p92, %p93
    %p95 = scmp.ne.s32.totalorder %s87, %s89
    %p96 = scmp.eq.s32.totalorder %s16, 1
    %p97 = por %p95, %p96
    %p98 = scmp.ne.s32.totalorder %s89, %s90
    %p99 = scmp.eq.s32.totalorder %s16, 0
    %p100 = por %p98, %p99
    %p101 = scmp.ne.s32.totalorder %s89, %s90
    %p102 = scmp.eq.s32.totalorder %s17, 1
    %p103 = por %p101, %p102
    %p105 = scmp.ne.s32.totalorder %s90, %s104
    %p106 = scmp.eq.s32.totalorder %s17, 0
    %p107 = por %p105, %p106
    %s109 = sadd.s32 %s108, 1
    %p112 = scmp.eq.s32.totalorder %s11, 1
    %p113 = scmp.ne.s32.totalorder %s108, %s110
    %p114 = scmp.eq.s32.totalorder %s11, 0
    %p115 = por %p113, %p114
    %p116 = scmp.ne.s32.totalorder %s108, %s110
    %p117 = scmp.eq.s32.totalorder %s16, 1
    %p118 = por %p116, %p117
    %p119 = scmp.ne.s32.totalorder %s110, %s111
    %p120 = scmp.eq.s32.totalorder %s16, 0
    %p121 = por %p119, %p120
    %p122 = scmp.ne.s32.totalorder %s110, %s111
    %p123 = scmp.eq.s32.totalorder %s17, 1
    %p124 = por %p122, %p123
    %p126 = scmp.ne.s32.totalorder %s111, %s125
    %p127 = scmp.eq.s32.totalorder %s17, 0
    %p128 = por %p126, %p127
    %s129 = ssub.s32 %s11, %s18
    %p130 = scmp.eq.s32.totalorder %s129, 0
    %s132 = sadd.s32 %s131, 1
    %s133 = scalar_select %p130, %s131, %s132
    %p136 = pneg %p130
    %p137 = scmp.eq.s32.totalorder %s11, 1
    %p138 = por %p136, %p137
    %p139 = scmp.ne.s32.totalorder %s131, %s134
    %p140 = scmp.eq.s32.totalorder %s11, 0
    %p141 = por %p139, %p140
    %p142 = scmp.ne.s32.totalorder %s131, %s134
    %p143 = scmp.eq.s32.totalorder %s16, 1
    %p144 = por %p142, %p143
    %p145 = scmp.ne.s32.totalorder %s134, %s135
    %p146 = scmp.eq.s32.totalorder %s16, 0
    %p147 = por %p145, %p146
    %p148 = scmp.ne.s32.totalorder %s134, %s135
    %p149 = scmp.eq.s32.totalorder %s17, 1
    %p150 = por %p148, %p149
    %p152 = scmp.ne.s32.totalorder %s135, %s151
    %p153 = scmp.eq.s32.totalorder %s17, 0
    %p154 = por %p152, %p153
    %p155 = scmp.le.s32.totalorder 1, %s11
    %p156 = scmp.lt.s32.totalorder %s11, 3
    %p157 = pnand %p155, %p156
    %p158 = pneg %p157
    // Predicated region
    $region9: #{se_module_forward.1} parent=5 // pred_check
      _
    $region10: #{se_module_forward.1} parent=5 // pred_check_branch
      %160 = sbr.rel (%p157) target = $region12
    $region11: #{se_module_forward.1} parent=5 // pred_region
      %s161 = ssub.s32 %s11, 1
      // Predicated region
      $region13: #{se_module_forward.1} parent=11 // pred_check
        %p162 = pneg %p58
      $region14: #{se_module_forward.1} parent=11 // pred_check_branch
        %164 = sbr.rel (%p162) target = $region16
      $region15: #{se_module_forward.1} parent=11 // pred_region
        _
      $region16: #{se_module_forward.1} parent=11 // pred_fallthru
        _
      // Predicated region
      $region17: #{se_module_forward.1} parent=11 // pred_check
        %p165 = pneg %p79
      $region18: #{se_module_forward.1} parent=11 // pred_check_branch
        %167 = sbr.rel (%p165) target = $region20
      $region19: #{se_module_forward.1} parent=11 // pred_region
        _
      $region20: #{se_module_forward.1} parent=11 // pred_fallthru
        _
      // Predicated region
      $region21: #{se_module_forward.1} parent=11 // pred_check
        %p168 = pneg %p100
      $region22: #{se_module_forward.1} parent=11 // pred_check_branch
        %170 = sbr.rel (%p168) target = $region24
      $region23: #{se_module_forward.1} parent=11 // pred_region
        _
      $region24: #{se_module_forward.1} parent=11 // pred_fallthru
        _
      // Predicated region
      $region25: #{se_module_forward.1} parent=11 // pred_check
        %p171 = pneg %p121
      $region26: #{se_module_forward.1} parent=11 // pred_check_branch
        %173 = sbr.rel (%p171) target = $region28
      $region27: #{se_module_forward.1} parent=11 // pred_region
        _
      $region28: #{se_module_forward.1} parent=11 // pred_fallthru
        _
    $region12: #{se_module_forward.1} parent=5 // pred_fallthru
      _
    %p174 = scmp.lt.s32.totalorder %s11, 2
    // Predicated region
    $region29: #{se_module_forward.1} parent=5 // pred_check
      %p175 = pneg %p174
    $region30: #{se_module_forward.1} parent=5 // pred_check_branch
      %177 = sbr.rel (%p175) target = $region32
    $region31: #{se_module_forward.1} parent=5 // pred_region
      // Predicated region
      $region33: #{se_module_forward.1} parent=31 // pred_check
        %p178 = pneg %p31
      $region34: #{se_module_forward.1} parent=31 // pred_check_branch
        %180 = sbr.rel (%p178) target = $region36
      $region35: #{se_module_forward.1} parent=31 // pred_region
        %p181 = scmp.lt.s32.totalorder %s11, 1
        %s182 = scalar_select %p181, %s11, 1
        %s183 = smul.addr %s182, 4
        %s184 = smul.addr %s183, 8
        %s185 = scalar_lea.vmem %s0, %s184
      $region36: #{se_module_forward.1} parent=31 // pred_fallthru
        _
    $region32: #{se_module_forward.1} parent=5 // pred_fallthru
      _
    %p186 = scmp.le.s32.totalorder 1, %s11
    %p187 = scmp.lt.s32.totalorder %s11, 3
    %p188 = pnand %p186, %p187
    %p189 = pneg %p188
    // Predicated region
    $region37: #{se_module_forward.1} parent=5 // pred_check
      _
    $region38: #{se_module_forward.1} parent=5 // pred_check_branch
      %191 = sbr.rel (%p188) target = $region40
    $region39: #{se_module_forward.1} parent=5 // pred_region
      %s192 = ssub.s32 %s11, 1
      %p193 = scmp.lt.s32.totalorder %s16, 1
      %s194 = scalar_select %p193, %s16, 1
      %s195 = smul.addr %s194, 4
      %s196 = smul.addr %s195, 8
      %s197 = scalar_lea.vmem %s0, %s196
      %p198 = pneg %p37
      %p199 = pneg %p34
      %p200 = pneg %p58
      %p201 = pneg %p55
      %p202 = pneg %p79
      %p203 = pneg %p76
      %p204 = pneg %p100
      %p205 = pneg %p97
      %p206 = pneg %p121
      %p207 = pneg %p118
      %p208 = pneg %p147
      %p209 = pneg %p144
      %p210 = scmp.lt.s32.totalorder %s16, 1
      %s211 = scalar_select %p210, %s16, 1
      %s212 = smul.addr %s211, 4
      %s213 = smul.addr %s212, 8
      %s214 = scalar_lea.vmem %s5, %s213
      %p215 = scmp.lt.s32.totalorder %s16, 1
      %s216 = scalar_select %p215, %s16, 1
      %s217 = smul.addr %s216, 4
      %s218 = smul.addr %s217, 8
      %s219 = scalar_lea.vmem %s0, %s218
      %p220 = scmp.lt.s32.totalorder %s16, 1
      %s221 = scalar_select %p220, %s16, 1
      %s222 = smul.addr %s221, 4
      %s223 = smul.addr %s222, 8
      %s224 = scalar_lea.vmem %s5, %s223
      %v225 = vld [vmem:[%s219] sm:$0xff]
      %v226 = vld [vmem:[%s219 + $0x8] sm:$0xff]
      %v227 = vld [vmem:[%s219 + $0x10] sm:$0xff]
      %v228 = vld [vmem:[%s219 + $0x18] sm:$0xff]
      %v229 = vadd.f32 %v225, %v226
      %230 = vadd.xlane.f32.xlu0 %v229
      %v231 = vpop.xlane.xlu0 %230
      %v232 = vadd.f32 %v227, %v228
      %233 = vadd.xlane.f32.xlu0 %v232
      %v234 = vpop.xlane.xlu0 %233
      %v235 = vmul.f32 %v231, 0.00390625
      %v236 = vmul.f32 %v234, 0.00390625
      %v237 = vld [vmem:[%s1] sm:$0xff]
      %v238 = vld [vmem:[%s1 + $0x8] sm:$0xff]
      %v239 = vmul.f32 %v235, %v237
      %v240 = vmul.f32 %v236, %v238
      %vm241 = vcmask 31744
      %v242 = vsel %vm241, %v239, 0.0
      %v243 = vsel %vm241, %v240, 0.0
      %v244 = vadd.f32 %v242, %v243
      %v245 = vrot.slane %v244, 4
      %v246 = vadd.f32 %v244, %v245
      %v247 = vrot.slane %v246, 2
      %v248 = vadd.f32 %v246, %v247
      %v249 = vrot.slane %v248, 1
      %v250 = vadd.f32 %v248, %v249
      %v251 = vld [vmem:[%s2] sm:$0x1]
      %v252 = vadd.f32 %v250, %v251
      %v253 = vmax.f32 %v252, 0.0
      %v254 = vld [vmem:[%s3] sm:$0xff]
      %v255 = vld [vmem:[%s3 + $0x8] sm:$0xff]
      %v256 = vlaneseq
      %v257 = vshrl.u32 %v256, 7
      %v258 = vsub.s32 0, %v257
      %v259 = vrot.slane %v253, %v258
      %v260 = vmul.f32 %v259, %v254
      %v261 = vmul.f32 %v259, %v255
      %v262 = vsel %vm241, %v260, 0.0
      %263 = vadd.xlane.f32.xlu0 %v262
      %v264 = vpop.xlane.xlu0 %263
      %v265 = vsel %vm241, %v261, 0.0
      %266 = vadd.xlane.f32.xlu0 %v265
      %v267 = vpop.xlane.xlu0 %266
      %v268 = vld [vmem:[%s4] sm:$0xff]
      %v269 = vld [vmem:[%s4 + $0x8] sm:$0xff]
      %v270 = vadd.f32 %v264, %v268
      %v271 = vadd.f32 %v267, %v269
      %v272 = vmul.f32 %v270, 0.16666667
      %v273 = vmul.f32 %v271, 0.16666667
      %v274 = vadd.f32 %v272, 0.5
      %v275 = vadd.f32 %v273, 0.5
      %v276 = vmax.f32 %v274, 0.0
      %v277 = vmax.f32 %v275, 0.0
      %v278 = vmin.f32 %v276, 1.0
      %v279 = vmin.f32 %v277, 1.0
      %281 = vset.pattern.permute.xlu0 0
      %282 = vperm.xlu0 %281, %v278
      %v283 = vpop.permute.xlu0 %282
      %286 = vset.pattern.permute.xlu0 0
      %287 = vperm.xlu0 %286, %v279
      %v288 = vpop.permute.xlu0 %287
      %v290 = vmul.f32 %v225, %v283
      %v291 = vmul.f32 %v226, %v283
      %v292 = vmul.f32 %v227, %v288
      %v293 = vmul.f32 %v228, %v288
      %294 = vst [vmem:[%s224] sm:$0xff] %v290
      %295 = vst [vmem:[%s224 + $0x8] sm:$0xff] %v291
      %296 = vst [vmem:[%s224 + $0x10] sm:$0xff] %v292
      %297 = vst [vmem:[%s224 + $0x18] sm:$0xff] %v293
      %p298 = scmp.lt.s32.totalorder %s16, 1
      %s299 = scalar_select %p298, %s16, 1
      %s300 = smul.addr %s299, 4
      %s301 = smul.addr %s300, 8
      %s302 = scalar_lea.vmem %s5, %s301
      // Predicated region
      $region41: #{se_module_forward.1} parent=39 // pred_check
        %p303 = pneg %p144
      $region42: #{se_module_forward.1} parent=39 // pred_check_branch
        %305 = sbr.rel (%p303) target = $region44
      $region43: #{se_module_forward.1} parent=39 // pred_region
        _
      $region44: #{se_module_forward.1} parent=39 // pred_fallthru
        _
    $region40: #{se_module_forward.1} parent=5 // pred_fallthru
      _
    %p306 = scmp.le.s32.totalorder 2, %s11
    // Predicated region
    $region45: #{se_module_forward.1} parent=5 // pred_check
      %p307 = pneg %p306
    $region46: #{se_module_forward.1} parent=5 // pred_check_branch
      %309 = sbr.rel (%p307) target = $region48
    $region47: #{se_module_forward.1} parent=5 // pred_region
      %s310 = ssub.s32 %s11, 2
      // Predicated region
      $region49: #{se_module_forward.1} parent=47 // pred_check
        %p311 = pneg %p150
      $region50: #{se_module_forward.1} parent=47 // pred_check_branch
        %313 = sbr.rel (%p311) target = $region52
      $region51: #{se_module_forward.1} parent=47 // pred_region
        %p314 = scmp.lt.s32.totalorder %s17, 1
        %s315 = scalar_select %p314, %s17, 1
        %s316 = smul.addr %s315, 4
        %s317 = smul.addr %s316, 8
        %s318 = scalar_lea.vmem %s5, %s317
      $region52: #{se_module_forward.1} parent=47 // pred_fallthru
        _
    $region48: #{se_module_forward.1} parent=5 // pred_fallthru
      _
  $region6: #{se_module_forward.1} parent=0 // loop_footer
    %s15 = sadd.s32 1, %s11
  $region7: #{se_module_forward.1} parent=0 // loop_footer_branch
    %10 = sbr.rel target = $region3
  $region8: #{se_module_forward.1} parent=0 // loop_exit
    _

</llo_original>
